<compile_context>
chip_gen: v7x
topology: tpu7x:2x2x1
jax: 0.10.0
libtpu: 0.0.40
codegen_flags: <defaults>
</compile_context>

<pallas_src>
import functools

import numpy as np

import jax
import jax.numpy as jnp
from jax.experimental import pallas as pl
from jax.experimental.pallas import tpu as pltpu


# ---------------------------------------------------------------------------
# Exact (erf-based) GELU, matching nn.GELU() default.  erf via the Abramowitz &
# Stegun 7.1.26 approximation (max abs err ~1.5e-7), built only from
# Mosaic-supported elementwise ops; the divide goes to the EUP slot.
def _gelu(x):
    z = jnp.abs(x) * 0.7071067811865476                      # |x| / sqrt(2)
    t = pl.reciprocal(1.0 + 0.3275911 * z, approx=True)      # EUP slot
    poly = ((((1.061405429 * t - 1.453152027) * t + 1.421413741) * t
             - 0.284496736) * t + 0.254829592) * t
    erf = jnp.sign(x) * (1.0 - poly * jnp.exp(-z * z))
    return 0.5 * x * (1.0 + erf)


# ---------------------------------------------------------------------------
# Boundary masks for the 9 taps of a zero-padded 3x3 depthwise conv in the
# flattened-spatial layout p = h*W + w.  Row t = 3*(dy+1)+(dx+1) is 1.0 where
# the source pixel (h+dy, w+dx) lies inside the image, else 0.0 (implicit pad).
def _build_tap_masks(H, W):
    P = H * W
    h = np.arange(P) // W
    w = np.arange(P) % W
    rows = []
    for dy in (-1, 0, 1):
        for dx in (-1, 0, 1):
            ok = np.ones(P, dtype=bool)
            if dy == -1:
                ok &= h >= 1
            elif dy == 1:
                ok &= h <= H - 2
            if dx == -1:
                ok &= w >= 1
            elif dx == 1:
                ok &= w <= W - 2
            rows.append(ok)
    return jnp.asarray(np.stack(rows)[:, None, :].astype(np.float32))  # (9,1,P)


# ---------------------------------------------------------------------------
# The fused kernel: one grid step == one batch element; everything stays on chip.
def _fused_encoder_kernel(*refs, H, W, roll_np):
    x_ref, mask_ref = refs[0], refs[1]
    o_ref = refs[-1]
    (a_dww, a_dwb, a_pww, a_pwb,
     b_dww, b_dwb, b_pww, b_pwb,
     c_dww, c_dwb, c_pww, c_pwb,
     d_dww, d_dwb, d_pww, d_pwb,
     e_dws, e_dwb, e_pww, e_pwb,
     f_dws, f_dwb, f_pww, f_pwb,
     bn1_s, bn1_b, bn2_s, bn2_b, bn3_s, bn3_b) = refs[2:-1]

    C, P = x_ref.shape[1], x_ref.shape[2]
    x = x_ref[0]                                   # (C, P) f32

    def dwconv3x3(v, dww_ref, dwb_ref):
        """Depthwise 3x3, stride 1, zero pad 1, on (C, P) with p = h*W + w."""
        acc = jnp.zeros_like(v)
        t = 0
        for dy in (-1, 0, 1):
            for dx in (-1, 0, 1):
                s = dy * W + dx                     # flat source offset
                if s == 0:
                    sh = v
                else:
                    shift = ((-s) if roll_np else s) % P
                    sh = pltpu.roll(v, shift, 1)    # XLU lane rotation
                tap = dww_ref[t]                    # (C, 1) per-channel weight
                if dy == 0 and dx == 0:
                    acc = acc + sh * tap
                else:
                    m = mask_ref[t]                 # (1, P) 0/1 boundary mask
                    acc = acc + (sh * m) * tap
                t += 1
        return acc + dwb_ref[...]                   # (C, 1) bias

    def pointwise(v, pww_ref, pwb_ref):
        """1x1 conv across channels: out[co,p] = sum_ci W[co,ci] * v[ci,p]."""
        if C <= 32:
            # VPU outer-product accumulation: exact f32, lane/sublane dense.
            acc = jnp.zeros_like(v)
            for ci in range(C):
                acc = acc + pww_ref[:, ci:ci + 1] * v[ci:ci + 1, :]
            y = acc
        else:
            # TODO(synk): cast operands to bf16 here for large C on v6e/v7x.
            y = jnp.dot(pww_ref[...], v, preferred_element_type=jnp.float32)
        return y + pwb_ref[...]

    def dsconv3x3(v, dww, dwb, pww, pwb, relu):
        y = pointwise(dwconv3x3(v, dww, dwb), pww, pwb)
        return jnp.maximum(y, 0.0) if relu else y

    def affine(v, s_ref, b_ref):                    # folded BN / depthwise-1x1
        return v * s_ref[...] + b_ref[...]

    # ---- forward (mirrors ExtractEncoder.forward) ----
    x1 = dsconv3x3(x, a_dww, a_dwb, a_pww, a_pwb, relu=True) + x
    t1 = dsconv3x3(x1, b_dww, b_dwb, b_pww, b_pwb, relu=True)
    x2 = dsconv3x3(t1, c_dww, c_dwb, c_pww, c_pwb, relu=True) + x1
    # conv31: DSConv1x1 -> GELU -> BN1
    x31 = affine(_gelu(pointwise(affine(x2, e_dws, e_dwb), e_pww, e_pwb)),
                 bn1_s, bn1_b)
    # conv3: DSConv3x3 (no activation) + residual
    x32 = dsconv3x3(x31, d_dww, d_dwb, d_pww, d_pwb, relu=False) + x31
    # conv32: GELU -> BN2 -> DSConv1x1 -> BN3, then residual with x2
    g = affine(affine(_gelu(x32), bn2_s, bn2_b), f_dws, f_dwb)
    x33 = affine(pointwise(g, f_pww, f_pwb), bn3_s, bn3_b)
    o_ref[0] = x33 + x2


# ---------------------------------------------------------------------------
def _flatten_params(p):
    w = []
    for name in ("ds_a", "ds_b", "ds_c", "ds_d"):
        w += list(p[name])
    for name in ("e", "f"):
        w += [p[f"{name}_dw_s"], p[f"{name}_dw_b"],
              p[f"{name}_pw_w"], p[f"{name}_pw_b"]]
    w += [p["bn1_s"], p["bn1_b"], p["bn2_s"], p["bn2_b"],
          p["bn3_s"], p["bn3_b"]]
    return w


def _const_spec(shape):
    zeros = (0,) * len(shape)
    return pl.BlockSpec(shape, lambda n: zeros)


def extract_encoder_forward(x_nchw, params, *, roll_np=True):
    N, C, H, W = x_nchw.shape
    P = H * W
    x = x_nchw.reshape(N, C, P).astype(jnp.float32)   # free reshape, no transpose
    masks = _build_tap_masks(H, W)
    wlist = _flatten_params(params)

    kernel = functools.partial(_fused_encoder_kernel, H=H, W=W, roll_np=roll_np)
    in_specs = [pl.BlockSpec((1, C, P), lambda n: (n, 0, 0)),
                _const_spec(masks.shape)]
    in_specs += [_const_spec(wt.shape) for wt in wlist]

    out = pl.pallas_call(
        kernel,
        out_shape=jax.ShapeDtypeStruct((N, C, P), jnp.float32),
        grid=(N,),
        in_specs=in_specs,
        out_specs=pl.BlockSpec((1, C, P), lambda n: (n, 0, 0)),
        compiler_params=pltpu.CompilerParams(
            dimension_semantics=("parallel",),        # batch across TCs (v7x)
            vmem_limit_bytes=32 * 1024 * 1024),
    )(x, masks, *wlist)
    return out.reshape(N, C, H, W)


# ---------------------------------------------------------------------------
# Tiny probe: detect pltpu.roll's rotation convention once at setup so the
# depthwise shifts are direction-correct regardless of the lowering convention.
def _roll_probe_kernel(x_ref, o_ref):
    o_ref[...] = pltpu.roll(x_ref[...], 1, 1)


def _detect_roll_convention():
    x = jnp.tile(jnp.arange(128, dtype=jnp.float32)[None, :], (8, 1))
    y = pl.pallas_call(
        _roll_probe_kernel,
        out_shape=jax.ShapeDtypeStruct((8, 128), jnp.float32),
        grid=(1,),
        in_specs=[pl.BlockSpec((8, 128), lambda i: (0, 0))],
        out_specs=pl.BlockSpec((8, 128), lambda i: (0, 0)),
    )(x)
    # np.roll convention: out[i] = in[i - shift]  ->  lane 0 wraps to 127.
    return bool(y[0, 0] == 127.0)


# ---------------------------------------------------------------------------
# Deterministic synthetic parameters.
def init_params(key, c):
    keys = iter(jax.random.split(key, 48))

    def nrm(shape, scale=0.2):
        return (scale * jax.random.normal(next(keys), shape)).astype(jnp.float32)

    p = {}
    # four 3x3 depthwise-separable convs: conv1, conv2[0], conv2[2], conv3
    for name in ("ds_a", "ds_b", "ds_c", "ds_d"):
        p[name] = (nrm((9, c, 1)),   # depthwise taps, index 3*ky+kx
                   nrm((c, 1)),      # depthwise bias
                   nrm((c, c)),      # pointwise weight (Cout, Cin)
                   nrm((c, 1)))      # pointwise bias
    # two 1x1 depthwise-separable convs: conv31[0], conv32[2]
    for name in ("e", "f"):
        p[f"{name}_dw_s"] = nrm((c, 1))
        p[f"{name}_dw_b"] = nrm((c, 1))
        p[f"{name}_pw_w"] = nrm((c, c))
        p[f"{name}_pw_b"] = nrm((c, 1))
    # three BatchNorm2d layers, folded to per-channel affine (eval mode)
    eps = 1e-5
    for i in (1, 2, 3):
        gamma = 1.0 + nrm((c, 1), 0.05)
        beta = nrm((c, 1), 0.05)
        mean = nrm((c, 1), 0.05)
        var = 1.0 + jnp.abs(nrm((c, 1), 0.05))
        s = gamma / jnp.sqrt(var + eps)
        p[f"bn{i}_s"] = s
        p[f"bn{i}_b"] = beta - mean * s
    return p


# ---------------------------------------------------------------------------
# Pure-JAX (non-Pallas) reference of ExtractEncoder.forward, for verification only.
def _reference_forward(x_nchw, p):
    x = x_nchw.astype(jnp.float32)
    N, C, H, W = x.shape

    def cvec(v):
        return v.reshape(1, C, 1, 1)

    def dw3x3(v, dww, dwb):                 # dww (9,C,1), dwb (C,1)
        vp = jnp.pad(v, ((0, 0), (0, 0), (1, 1), (1, 1)))
        acc = jnp.zeros_like(v)
        for ky in range(3):
            for kx in range(3):
                acc = acc + vp[:, :, ky:ky + H, kx:kx + W] * cvec(dww[3 * ky + kx])
        return acc + cvec(dwb)

    def pw1x1(v, pww, pwb):                 # pww (Cout,Cin), pwb (C,1)
        y = jnp.einsum("oc,nchw->nohw", pww, v, precision="highest")
        return y + cvec(pwb)

    def ds3(v, dww, dwb, pww, pwb, relu):
        y = pw1x1(dw3x3(v, dww, dwb), pww, pwb)
        return jnp.maximum(y, 0.0) if relu else y

    def aff(v, s, b):
        return v * cvec(s) + cvec(b)

    gelu = lambda v: jax.nn.gelu(v, approximate=False)

    x1 = ds3(x, *p["ds_a"], relu=True) + x
    t = ds3(x1, *p["ds_b"], relu=True)
    x2 = ds3(t, *p["ds_c"], relu=True) + x1
    x31 = aff(gelu(pw1x1(aff(x2, p["e_dw_s"], p["e_dw_b"]),
                         p["e_pw_w"], p["e_pw_b"])),
              p["bn1_s"], p["bn1_b"])
    x32 = ds3(x31, *p["ds_d"], relu=False) + x31
    g = aff(aff(gelu(x32), p["bn2_s"], p["bn2_b"]), p["f_dw_s"], p["f_dw_b"])
    x33 = aff(pw1x1(g, p["f_pw_w"], p["f_pw_b"]), p["bn3_s"], p["bn3_b"])
    return x33 + x2


# ---------------------------------------------------------------------------
if __name__ == "__main__":
    # dim_in == dim_out (required by the module's residual connections).
    N, C, H, W = 2, 8, 16, 16
    key = jax.random.PRNGKey(0)
    kx, kp = jax.random.split(key)
    x = jax.random.normal(kx, (N, C, H, W), jnp.float32)
    params = init_params(kp, C)

    roll_np = _detect_roll_convention()
    out = extract_encoder_forward(x, params, roll_np=roll_np)
    jax.block_until_ready(out)
    assert out.shape == (N, C, H, W)
    assert out.dtype == jnp.float32

    # Verify against the pure-JAX reference (tolerance covers the erf/reciprocal
    # approximations in the in-kernel GELU; structural errors are O(0.1+)).
    ref = _reference_forward(x, params)
    err = float(jnp.max(jnp.abs(out - ref)))
    assert err < 2e-2, f"Pallas kernel mismatch vs reference: max abs err {err}"
    print("KERNEL_OK")
</pallas_src>

<mosaic_0001>
module attributes {stable_mosaic.version = 11 : i64} {
  func.func @_roll_probe_kernel(%arg0: i32, %arg1: memref<8x128xf32, #tpu.memory_space<vmem>>, %arg2: memref<8x128xf32, #tpu.memory_space<vmem>>) attributes {dimension_semantics = [#tpu.dimension_semantics<arbitrary>], iteration_bounds = array<i64: 1>, scalar_prefetch = 0 : i64, scratch_operands = 0 : i64, tpu.core_type = #tpu.core_type<tc>, window_params = [{pipeline_mode = #tpu.pipeline_mode<synchronous>, transform_indices = @transform_0, window_bounds = array<i64: 8, 128>}, {pipeline_mode = #tpu.pipeline_mode<synchronous>, transform_indices = @transform_1, window_bounds = array<i64: 8, 128>}]} {
    %c0 = arith.constant 0 : index
    %c0_0 = arith.constant 0 : index
    %0 = vector.load %arg1[%c0, %c0_0] : memref<8x128xf32, #tpu.memory_space<vmem>>, vector<8x128xf32>
    %c1_i32 = arith.constant 1 : i32
    %1 = tpu.dynamic_rotate %0 by %c1_i32 dim 1 : vector<8x128xf32>, i32 -> vector<8x128xf32>
    %c0_1 = arith.constant 0 : index
    %c0_2 = arith.constant 0 : index
    %2 = vector.load %arg2[%c0_1, %c0_2] : memref<8x128xf32, #tpu.memory_space<vmem>>, vector<8x128xf32>
    tpu.vector_store %arg2[%c0_1, %c0_2], %1 {strides = array<i32>} : memref<8x128xf32, #tpu.memory_space<vmem>>, vector<8x128xf32>,
    return
  }
  func.func @transform_0(%arg0: i32) -> (i32, i32) {
    %c0_i32 = arith.constant 0 : i32
    %c0_i32_0 = arith.constant 0 : i32
    %c0_i32_1 = arith.constant 0 : i32
    return %c0_i32, %c0_i32_0 : i32, i32
  }
  func.func @transform_1(%arg0: i32) -> (i32, i32) {
    %c0_i32 = arith.constant 0 : i32
    %c0_i32_0 = arith.constant 0 : i32
    %c0_i32_1 = arith.constant 0 : i32
    return %c0_i32, %c0_i32_0 : i32, i32
  }
}

</mosaic_0001>

<llo_original>
// kernel: tpu_custom_call.1
$region0: #{tpu_custom_call.1}
  #allocation0 [shape = 'u32[]', space=smem, size = 0x4, offset = 0x4, fixed_abs, tag = 'smem constant byte address 0x4 - core index']
  #allocation1 [shape = 'u32[144,128]{1,0:T(1,128)}', space=vmem, size = 0x12000, scoped, tag = 'internal scratch']
  %s0 = inlined_call_operand.hbm [shape: f32[8,128], index: 0, kind: input, shape index: {}]
  %s1 = inlined_call_operand.hbm [shape: f32[8,128], index: 1, kind: output, shape index: {}]
  %s2 = sld [smem:[#allocation0]]
  $region18: #{tpu_custom_call.1} parent=0
    _
  %s4 = ssub.s32 1, %s2
  %s5 = scalar_select 0, %s4, %s2
  $region1: #{tpu_custom_call.1} parent=0
    #allocation2 [shape = 'u8[4096]{0}', space=vmem, size = 0x1000, scoped, tag = 'input window, operand 0, single buffered']
    #allocation3 [shape = 's32[1]{0}', space=sflag, size = 0x4, scoped, tag = 'scoped memory for tpu_custom_call.1']
    #allocation4 [shape = 's32[1]{0}', space=sflag, size = 0x4, scoped, tag = 'scoped memory for tpu_custom_call.1']
    #allocation5 [shape = 'u8[4096]{0}', space=vmem, size = 0x1000, scoped, tag = 'output window, operand 0, single buffered']
    %6 = vsyncpa [#allocation3], 0
    %7 = vsyncpa [#allocation4], 0
    // Predicated region
    $region2: #{tpu_custom_call.1} parent=1 // pred_check
      _
    $region3: #{tpu_custom_call.1} parent=1 // pred_check_branch
      %9 = sbr.rel (0) target = $region5
    $region4: #{tpu_custom_call.1} parent=1 // pred_region
      %s11 = ssub.s32 128, 128
      %12 = vsyncadd [#allocation3], %s11
      %s14 = sshll.u32 [#allocation2], 4
      %s15 = int_to_ptr.vmem [resolvable:$true] %s14
      %17 = dma.hbm_to_vmem [thread:$0]  %s0, 128, %s15, [#allocation3]
    $region5: #{tpu_custom_call.1} parent=1 // pred_fallthru
      _
    // Predicated region
    $region6: #{tpu_custom_call.1} parent=1 // pred_check
      _
    $region7: #{tpu_custom_call.1} parent=1 // pred_check_branch
      %19 = sbr.rel (0) target = $region9
    $region8: #{tpu_custom_call.1} parent=1 // pred_region
      %20 = dma.done [#allocation3], 128
    $region9: #{tpu_custom_call.1} parent=1 // pred_fallthru
      _
    %v21 = vld [vmem:[#allocation2] sm:$0xff]
    %22 = vrot.lane.b32.xlu0 %v21, 1
    %v23 = vpop.permute.xlu0 %22
    %24 = vst [vmem:[#allocation5] sm:$0xff] %v23
    // Predicated region
    $region10: #{tpu_custom_call.1} parent=1 // pred_check
      _
    $region11: #{tpu_custom_call.1} parent=1 // pred_check_branch
      %26 = sbr.rel (0) target = $region13
    $region12: #{tpu_custom_call.1} parent=1 // pred_region
      %s28 = ssub.s32 128, 128
      %29 = vsyncadd [#allocation4], %s28
      %s31 = sshll.u32 [#allocation5], 4
      %s32 = int_to_ptr.vmem [resolvable:$true] %s31
      %34 = dma.vmem_to_hbm [thread:$0]  %s32, 128, %s1, [#allocation4]
    $region13: #{tpu_custom_call.1} parent=1 // pred_fallthru
      _
    // Predicated region
    $region14: #{tpu_custom_call.1} parent=1 // pred_check
      _
    $region15: #{tpu_custom_call.1} parent=1 // pred_check_branch
      %36 = sbr.rel (0) target = $region17
    $region16: #{tpu_custom_call.1} parent=1 // pred_region
      %37 = dma.done [#allocation4], 128
    $region17: #{tpu_custom_call.1} parent=1 // pred_fallthru
      _
    %38 = vsyncpa [#allocation3], 1
    %39 = vsyncpa [#allocation4], 1

</llo_original>
